<compile_context>
chip_gen: v5e
topology: v5e:2x2
jax: 0.10.0
libtpu: 0.0.40
codegen_flags: <defaults>
</compile_context>

<pallas_src>
import functools

import jax
import jax.numpy as jnp
from jax.experimental import pallas as pl
from jax.experimental.pallas import tpu as pltpu

EPS = 1e-6


def _tent(x):
    return jnp.maximum(1.0 - jnp.abs(x), jnp.float32(EPS))


def tent_mlp_kernel(x_ref, w1_ref, b1_ref, w2_ref, b2_ref, w3_ref, b3_ref, o_ref):
    # x_ref: (2, TB) f32, w1_ref: (64, 2) f32, b1_ref: (64, 1) f32
    # w2_ref: (64, 64) bf16, b2_ref: (64, 1) f32
    # w3_ref: (1, 64) bf16, b3_ref: (1, 1) f32, o_ref: (1, TB) f32

    # fc1: K=2 contraction -> two VPU broadcast-FMAs, skip the MXU entirely.
    # Operands come straight from ref slices (no full-tile value materialized).
    h = (w1_ref[:, 0:1] * x_ref[0:1, :]
         + w1_ref[:, 1:2] * x_ref[1:2, :]
         + b1_ref[...])
    h = _tent(h)  # (64, TB) f32

    # fc2: (64, 64) @ (64, TB) on the MXU, bf16 inputs / f32 accumulation.
    h = jnp.dot(w2_ref[...], h.astype(w2_ref.dtype),
                preferred_element_type=jnp.float32) + b2_ref[...]
    h = _tent(h)  # (64, TB) f32

    # fc3: (1, 64) @ (64, TB) -> lane-dense (1, TB) output (bf16 in, f32 acc).
    out = jnp.dot(w3_ref[...], h.astype(w3_ref.dtype),
                  preferred_element_type=jnp.float32) + b3_ref[...]
    o_ref[...] = out.astype(o_ref.dtype)


def _round_up(v, m):
    return ((v + m - 1) // m) * m


@functools.partial(jax.jit, static_argnames=("tb",))
def _tent_forward(x, w1, b1, w2, b2, w3, b3, *, tb):
    in_f = w1.shape[1]     # 2
    h1 = w1.shape[0]       # 64
    h2 = w2.shape[0]       # 64
    out_f = w3.shape[0]    # 1

    B = x.shape[0]
    # Adaptive batch tile: big enough to swamp per-step overhead, clamped so
    # small batches aren't massively padded and large batches give >=2 grid
    # steps (both TensorCores busy on v7x).
    tb_eff = min(tb, max(256, _round_up(-(-B // 2), 256)))
    n_tiles = pl.cdiv(B, tb_eff)
    B_pad = n_tiles * tb_eff

    # Feature-major input (batch on the lane axis), zero-padded batch tail.
    # Transpose + pad + cast fuse with the pallas_call under this jit.
    x_t = jnp.pad(x.T.astype(jnp.float32), ((0, 0), (0, B_pad - B)))

    # Column-vector biases for the transposed layout.
    b1c = b1.reshape(h1, 1).astype(jnp.float32)
    b2c = b2.reshape(h2, 1).astype(jnp.float32)
    b3c = b3.reshape(out_f, 1).astype(jnp.float32)
    w1f = w1.astype(jnp.float32)      # fc1 stays on the VPU in f32 (K=2)
    w2b = w2.astype(jnp.bfloat16)     # MXU dots: bf16 in, f32 accumulate
    w3b = w3.astype(jnp.bfloat16)

    flops = 2 * B_pad * (in_f * h1 + h1 * h2 + h2 * out_f)
    param_bytes = sum(int(a.size) * a.dtype.itemsize
                      for a in (w1f, b1c, w2b, b2c, w3b, b3c))
    bytes_accessed = int(x_t.size) * 4 + B_pad * out_f * 4 + param_bytes

    const_map = lambda i: (0, 0)
    out_t = pl.pallas_call(
        tent_mlp_kernel,
        out_shape=jax.ShapeDtypeStruct((out_f, B_pad), jnp.float32),
        grid=(n_tiles,),
        in_specs=[
            pl.BlockSpec((in_f, tb_eff), lambda i: (0, i)),   # x (feature-major)
            pl.BlockSpec((h1, in_f), const_map),              # W1 (VMEM-resident)
            pl.BlockSpec((h1, 1), const_map),                 # b1
            pl.BlockSpec((h2, h1), const_map),                # W2 (bf16)
            pl.BlockSpec((h2, 1), const_map),                 # b2
            pl.BlockSpec((out_f, h2), const_map),             # W3 (bf16)
            pl.BlockSpec((out_f, 1), const_map),              # b3
        ],
        out_specs=pl.BlockSpec((out_f, tb_eff), lambda i: (0, i)),
        compiler_params=pltpu.CompilerParams(
            dimension_semantics=("parallel",),
            vmem_limit_bytes=40 << 20,   # safe under v7x's 64 MiB physical VMEM
        ),
        cost_estimate=pl.CostEstimate(
            flops=flops, transcendentals=0, bytes_accessed=bytes_accessed
        ),
    )(x_t, w1f, b1c, w2b, b2c, w3b, b3c)

    # Back to (B, 1) row-major, dropping batch padding (fused under the jit).
    return out_t[:, :B].T


def tent_neural_network(x, params, *, tb=16384):
    """x: (B, 2) float32 -> (B, 1) float32.

    params are PyTorch-convention: W (out, in), b (out,).  `tb` is the maximum
    batch tile (multiple of 256); sweep 8192-32768 for large B.
    """
    assert tb % 256 == 0, "batch tile must be a multiple of 256"
    w1, b1, w2, b2, w3, b3 = params
    return _tent_forward(x, w1, b1, w2, b2, w3, b3, tb=tb)


def init_params(key):
    """Deterministic init mimicking PyTorch nn.Linear default (uniform +-1/sqrt(fan_in)).

    Weights are PyTorch-convention (out_features, in_features); biases (out_features,).
    """
    def linear(key, fan_in, fan_out):
        kw, kb = jax.random.split(key)
        bound = 1.0 / jnp.sqrt(fan_in)
        w = jax.random.uniform(kw, (fan_out, fan_in), jnp.float32, -bound, bound)
        b = jax.random.uniform(kb, (fan_out,), jnp.float32, -bound, bound)
        return w, b

    k1, k2, k3 = jax.random.split(key, 3)
    w1, b1 = linear(k1, 2, 64)
    w2, b2 = linear(k2, 64, 64)
    w3, b3 = linear(k3, 64, 1)
    return (w1, b1, w2, b2, w3, b3)


def reference_forward(x, params):
    """Pure-JAX f32 reference matching the PyTorch forward semantics."""
    w1, b1, w2, b2, w3, b3 = params
    h = jnp.maximum(1.0 - jnp.abs(x @ w1.T + b1), EPS)
    h = jnp.maximum(1.0 - jnp.abs(h @ w2.T + b2), EPS)
    return h @ w3.T + b3


if __name__ == "__main__":
    key = jax.random.PRNGKey(0)
    kx, kx2, kp = jax.random.split(key, 3)
    params = init_params(kp)

    # Small smoke test (single grid step, heavily clamped tile).
    B = 8
    x = jax.random.normal(kx, (B, 2), jnp.float32)
    out = jax.block_until_ready(tent_neural_network(x, params))
    ref = reference_forward(x, params)
    assert out.shape == (B, 1), out.shape
    # bf16 MXU inputs (f32 accumulation) => loosened tolerance vs f32 reference.
    assert jnp.allclose(out, ref, atol=3e-2, rtol=3e-2), (out, ref)

    # Medium test exercising multiple grid steps (megacore path on v7x).
    B2 = 2048
    x2 = jax.random.normal(kx2, (B2, 2), jnp.float32)
    out2 = jax.block_until_ready(tent_neural_network(x2, params))
    ref2 = reference_forward(x2, params)
    assert out2.shape == (B2, 1), out2.shape
    assert jnp.allclose(out2, ref2, atol=3e-2, rtol=3e-2)

    print("KERNEL_OK")
</pallas_src>

<mosaic_0001>
module attributes {stable_mosaic.version = 11 : i64} {
  func.func @tent_mlp_kernel(%arg0: i32, %arg1: memref<2x256xf32, #tpu.memory_space<vmem>>, %arg2: memref<64x2xf32, #tpu.memory_space<vmem>>, %arg3: memref<64x1xf32, #tpu.memory_space<vmem>>, %arg4: memref<64x64xbf16, #tpu.memory_space<vmem>>, %arg5: memref<64x1xf32, #tpu.memory_space<vmem>>, %arg6: memref<1x64xbf16, #tpu.memory_space<vmem>>, %arg7: memref<1x1xf32, #tpu.memory_space<vmem>>, %arg8: memref<1x256xf32, #tpu.memory_space<vmem>>) attributes {dimension_semantics = [#tpu.dimension_semantics<parallel>], iteration_bounds = array<i64: 1>, scalar_prefetch = 0 : i64, scratch_operands = 0 : i64, tpu.core_type = #tpu.core_type<tc>, window_params = [{transform_indices = @transform_0, window_bounds = array<i64: 2, 256>}, {pipeline_mode = #tpu.pipeline_mode<synchronous>, transform_indices = @transform_1, window_bounds = array<i64: 64, 2>}, {pipeline_mode = #tpu.pipeline_mode<synchronous>, transform_indices = @transform_2, window_bounds = array<i64: 64, 1>}, {pipeline_mode = #tpu.pipeline_mode<synchronous>, transform_indices = @transform_3, window_bounds = array<i64: 64, 64>}, {pipeline_mode = #tpu.pipeline_mode<synchronous>, transform_indices = @transform_4, window_bounds = array<i64: 64, 1>}, {pipeline_mode = #tpu.pipeline_mode<synchronous>, transform_indices = @transform_5, window_bounds = array<i64: 1, 64>}, {pipeline_mode = #tpu.pipeline_mode<synchronous>, transform_indices = @transform_6, window_bounds = array<i64: 1, 1>}, {transform_indices = @transform_7, window_bounds = array<i64: 1, 256>}]} {
    %c0 = arith.constant 0 : index
    %c0_0 = arith.constant 0 : index
    %0 = vector.load %arg2[%c0, %c0_0] : memref<64x2xf32, #tpu.memory_space<vmem>>, vector<64x1xf32>
    %c0_1 = arith.constant 0 : index
    %c0_2 = arith.constant 0 : index
    %1 = vector.load %arg1[%c0_1, %c0_2] : memref<2x256xf32, #tpu.memory_space<vmem>>, vector<1x256xf32>
    %2 = vector.broadcast %0 : vector<64x1xf32> to vector<64x256xf32>
    %3 = vector.broadcast %1 : vector<1x256xf32> to vector<64x256xf32>
    %4 = arith.mulf %2, %3 : vector<64x256xf32>
    %c0_3 = arith.constant 0 : index
    %c1 = arith.constant 1 : index
    %5 = vector.load %arg2[%c0_3, %c1] : memref<64x2xf32, #tpu.memory_space<vmem>>, vector<64x1xf32>
    %c1_4 = arith.constant 1 : index
    %c0_5 = arith.constant 0 : index
    %6 = vector.load %arg1[%c1_4, %c0_5] : memref<2x256xf32, #tpu.memory_space<vmem>>, vector<1x256xf32>
    %7 = vector.broadcast %5 : vector<64x1xf32> to vector<64x256xf32>
    %8 = vector.broadcast %6 : vector<1x256xf32> to vector<64x256xf32>
    %9 = arith.mulf %7, %8 : vector<64x256xf32>
    %10 = arith.addf %4, %9 : vector<64x256xf32>
    %c0_6 = arith.constant 0 : index
    %c0_7 = arith.constant 0 : index
    %11 = vector.load %arg3[%c0_6, %c0_7] : memref<64x1xf32, #tpu.memory_space<vmem>>, vector<64x1xf32>
    %12 = vector.broadcast %11 : vector<64x1xf32> to vector<64x256xf32>
    %13 = arith.addf %10, %12 : vector<64x256xf32>
    %14 = math.absf %13 : vector<64x256xf32>
    %cst = arith.constant 1.000000e+00 : f32
    %15 = vector.broadcast %cst : f32 to vector<64x256xf32>
    %16 = arith.subf %15, %14 : vector<64x256xf32>
    %cst_8 = arith.constant 9.99999997E-7 : f32
    %17 = vector.broadcast %cst_8 : f32 to vector<64x256xf32>
    %18 = arith.maximumf %16, %17 : vector<64x256xf32>
    %c0_9 = arith.constant 0 : index
    %c0_10 = arith.constant 0 : index
    %19 = vector.load %arg4[%c0_9, %c0_10] : memref<64x64xbf16, #tpu.memory_space<vmem>>, vector<64x64xbf16>
    %20 = arith.truncf %18 : vector<64x256xf32> to vector<64x256xbf16>
    %cst_11 = arith.constant dense<0.000000e+00> : vector<64x256xf32>
    %21 = tpu.matmul %19, %20, %cst_11 {dimension_numbers = #tpu.dot_dimension_numbers<[1], [0], [0], [1], [0, 0, 1, 1], [], []>} : vector<64x64xbf16>, vector<64x256xbf16>, vector<64x256xf32> -> vector<64x256xf32>
    %c0_12 = arith.constant 0 : index
    %c0_13 = arith.constant 0 : index
    %22 = vector.load %arg5[%c0_12, %c0_13] : memref<64x1xf32, #tpu.memory_space<vmem>>, vector<64x1xf32>
    %23 = vector.broadcast %22 : vector<64x1xf32> to vector<64x256xf32>
    %24 = arith.addf %21, %23 : vector<64x256xf32>
    %25 = math.absf %24 : vector<64x256xf32>
    %cst_14 = arith.constant 1.000000e+00 : f32
    %26 = vector.broadcast %cst_14 : f32 to vector<64x256xf32>
    %27 = arith.subf %26, %25 : vector<64x256xf32>
    %cst_15 = arith.constant 9.99999997E-7 : f32
    %28 = vector.broadcast %cst_15 : f32 to vector<64x256xf32>
    %29 = arith.maximumf %27, %28 : vector<64x256xf32>
    %c0_16 = arith.constant 0 : index
    %c0_17 = arith.constant 0 : index
    %30 = vector.load %arg6[%c0_16, %c0_17] : memref<1x64xbf16, #tpu.memory_space<vmem>>, vector<1x64xbf16>
    %31 = arith.truncf %29 : vector<64x256xf32> to vector<64x256xbf16>
    %cst_18 = arith.constant dense<0.000000e+00> : vector<1x256xf32>
    %32 = tpu.matmul %30, %31, %cst_18 {dimension_numbers = #tpu.dot_dimension_numbers<[1], [0], [0], [1], [0, 0, 1, 1], [], []>} : vector<1x64xbf16>, vector<64x256xbf16>, vector<1x256xf32> -> vector<1x256xf32>
    %c0_19 = arith.constant 0 : index
    %c0_20 = arith.constant 0 : index
    %33 = vector.load %arg7[%c0_19, %c0_20] : memref<1x1xf32, #tpu.memory_space<vmem>>, vector<1x1xf32>
    %34 = vector.broadcast %33 : vector<1x1xf32> to vector<1x256xf32>
    %35 = arith.addf %32, %34 : vector<1x256xf32>
    %c0_21 = arith.constant 0 : index
    %c0_22 = arith.constant 0 : index
    %36 = vector.load %arg8[%c0_21, %c0_22] : memref<1x256xf32, #tpu.memory_space<vmem>>, vector<1x256xf32>
    tpu.vector_store %arg8[%c0_21, %c0_22], %35 {strides = array<i32>} : memref<1x256xf32, #tpu.memory_space<vmem>>, vector<1x256xf32>,
    return
  }
  func.func @transform_0(%arg0: i32) -> (i32, i32) {
    %c0_i32 = arith.constant 0 : i32
    %c0_i32_0 = arith.constant 0 : i32
    return %c0_i32, %arg0 : i32, i32
  }
  func.func @transform_1(%arg0: i32) -> (i32, i32) {
    %c0_i32 = arith.constant 0 : i32
    %c0_i32_0 = arith.constant 0 : i32
    %c0_i32_1 = arith.constant 0 : i32
    return %c0_i32, %c0_i32_0 : i32, i32
  }
  func.func @transform_2(%arg0: i32) -> (i32, i32) {
    %c0_i32 = arith.constant 0 : i32
    %c0_i32_0 = arith.constant 0 : i32
    %c0_i32_1 = arith.constant 0 : i32
    return %c0_i32, %c0_i32_0 : i32, i32
  }
  func.func @transform_3(%arg0: i32) -> (i32, i32) {
    %c0_i32 = arith.constant 0 : i32
    %c0_i32_0 = arith.constant 0 : i32
    %c0_i32_1 = arith.constant 0 : i32
    return %c0_i32, %c0_i32_0 : i32, i32
  }
  func.func @transform_4(%arg0: i32) -> (i32, i32) {
    %c0_i32 = arith.constant 0 : i32
    %c0_i32_0 = arith.constant 0 : i32
    %c0_i32_1 = arith.constant 0 : i32
    return %c0_i32, %c0_i32_0 : i32, i32
  }
  func.func @transform_5(%arg0: i32) -> (i32, i32) {
    %c0_i32 = arith.constant 0 : i32
    %c0_i32_0 = arith.constant 0 : i32
    %c0_i32_1 = arith.constant 0 : i32
    return %c0_i32, %c0_i32_0 : i32, i32
  }
  func.func @transform_6(%arg0: i32) -> (i32, i32) {
    %c0_i32 = arith.constant 0 : i32
    %c0_i32_0 = arith.constant 0 : i32
    %c0_i32_1 = arith.constant 0 : i32
    return %c0_i32, %c0_i32_0 : i32, i32
  }
  func.func @transform_7(%arg0: i32) -> (i32, i32) {
    %c0_i32 = arith.constant 0 : i32
    %c0_i32_0 = arith.constant 0 : i32
    return %c0_i32, %arg0 : i32, i32
  }
}

</mosaic_0001>

<llo_original>
// kernel: _tent_forward.1
$region0: #{_tent_forward.1}
  #allocation0 [shape = 'u32[]', space=smem, size = 0x4, offset = 0x4, fixed_abs, tag = 'smem constant byte address 0x4 - core index']
  #allocation1 [shape = 'u32[72,128]{1,0:T(1,128)}', space=vmem, size = 0x9000, scoped, tag = 'internal scratch']
  #allocation2 [shape = 'f32[1,1]{1,0:T(1,128)S(1)}', space=vmem, size = 0x200, scoped, tag = 'scoped memory for _tent_forward.1']
  %s0 = inlined_call_operand.vmem [shape: f32[2,256], index: 0, kind: input, shape index: {}]
  %s1 = inlined_call_operand.vmem [shape: f32[64,2], index: 1, kind: input, shape index: {}]
  %s2 = inlined_call_operand.vmem [shape: f32[64,1], index: 2, kind: input, shape index: {}]
  %s3 = inlined_call_operand.vmem [shape: bf16[64,64], index: 3, kind: input, shape index: {}]
  %s4 = inlined_call_operand.vmem [shape: f32[64,1], index: 4, kind: input, shape index: {}]
  %s5 = inlined_call_operand.vmem [shape: bf16[1,64], index: 5, kind: input, shape index: {}]
  %s6 = inlined_call_operand.<no memory space> [shape: f32[1,1], index: 6, kind: input, shape index: {}]
  %s7 = inlined_call_operand.vmem [shape: f32[1,256], index: 7, kind: output, shape index: {}]
  %s8 = sld [smem:[#allocation0]]
  $region38: #{_tent_forward.1} parent=0
    _
  %s10 = ssub.s32 1, %s8
  %s11 = scalar_select 0, %s10, %s8
  %v12 = vstv %s6
  %13 = vst [vmem:[#allocation2] sm:$0x1] %v12
  // Predicated region
  $region2: #{_tent_forward.1} parent=0 // pred_check
    _
  $region3: #{_tent_forward.1} parent=0 // pred_check_branch
    %15 = sbr.rel (0) target = $region5
  $region4: #{_tent_forward.1} parent=0 // pred_region
    _
  $region5: #{_tent_forward.1} parent=0 // pred_fallthru
    _
  // Predicated region
  $region6: #{_tent_forward.1} parent=0 // pred_check
    _
  $region7: #{_tent_forward.1} parent=0 // pred_check_branch
    %17 = sbr.rel (0) target = $region9
  $region8: #{_tent_forward.1} parent=0 // pred_region
    _
  $region9: #{_tent_forward.1} parent=0 // pred_fallthru
    _
  // Predicated region
  $region10: #{_tent_forward.1} parent=0 // pred_check
    _
  $region11: #{_tent_forward.1} parent=0 // pred_check_branch
    %19 = sbr.rel (0) target = $region13
  $region12: #{_tent_forward.1} parent=0 // pred_region
    _
  $region13: #{_tent_forward.1} parent=0 // pred_fallthru
    _
  // Predicated region
  $region14: #{_tent_forward.1} parent=0 // pred_check
    _
  $region15: #{_tent_forward.1} parent=0 // pred_check_branch
    %21 = sbr.rel (0) target = $region17
  $region16: #{_tent_forward.1} parent=0 // pred_region
    _
  $region17: #{_tent_forward.1} parent=0 // pred_fallthru
    _
  // Predicated region
  $region18: #{_tent_forward.1} parent=0 // pred_check
    _
  $region19: #{_tent_forward.1} parent=0 // pred_check_branch
    %23 = sbr.rel (0) target = $region21
  $region20: #{_tent_forward.1} parent=0 // pred_region
    _
  $region21: #{_tent_forward.1} parent=0 // pred_fallthru
    _
  // Predicated region
  $region22: #{_tent_forward.1} parent=0 // pred_check
    _
  $region23: #{_tent_forward.1} parent=0 // pred_check_branch
    %25 = sbr.rel (0) target = $region25
  $region24: #{_tent_forward.1} parent=0 // pred_region
    _
  $region25: #{_tent_forward.1} parent=0 // pred_fallthru
    _
  // Predicated region
  $region26: #{_tent_forward.1} parent=0 // pred_check
    _
  $region27: #{_tent_forward.1} parent=0 // pred_check_branch
    %27 = sbr.rel (0) target = $region29
  $region28: #{_tent_forward.1} parent=0 // pred_region
    _
  $region29: #{_tent_forward.1} parent=0 // pred_fallthru
    _
  %v29 = vld [vmem:[%s1] sm:$0xff]
  %v30 = vld [vmem:[%s1 + $0x8] sm:$0xff]
  %v31 = vld [vmem:[%s1 + $0x10] sm:$0xff]
  %v32 = vld [vmem:[%s1 + $0x18] sm:$0xff]
  %v33 = vld [vmem:[%s1 + $0x20] sm:$0xff]
  %v34 = vld [vmem:[%s1 + $0x28] sm:$0xff]
  %v35 = vld [vmem:[%s1 + $0x30] sm:$0xff]
  %v36 = vld [vmem:[%s1 + $0x38] sm:$0xff]
  %v37 = vld [vmem:[%s0] ss:$2 sm:$0x3]
  %39 = vset.pattern.permute.xlu0 0
  %40 = vperm.xlu0 %39, %v29
  %v41 = vpop.permute.xlu0 %40
  %44 = vset.pattern.permute.xlu0 0
  %45 = vperm.xlu0 %44, %v30
  %v46 = vpop.permute.xlu0 %45
  %49 = vset.pattern.permute.xlu0 0
  %50 = vperm.xlu0 %49, %v31
  %v51 = vpop.permute.xlu0 %50
  %54 = vset.pattern.permute.xlu0 0
  %55 = vperm.xlu0 %54, %v32
  %v56 = vpop.permute.xlu0 %55
  %59 = vset.pattern.permute.xlu0 0
  %60 = vperm.xlu0 %59, %v33
  %v61 = vpop.permute.xlu0 %60
  %64 = vset.pattern.permute.xlu0 0
  %65 = vperm.xlu0 %64, %v34
  %v66 = vpop.permute.xlu0 %65
  %69 = vset.pattern.permute.xlu0 0
  %70 = vperm.xlu0 %69, %v35
  %v71 = vpop.permute.xlu0 %70
  %74 = vset.pattern.permute.xlu0 0
  %75 = vperm.xlu0 %74, %v36
  %v76 = vpop.permute.xlu0 %75
  %v79 = vperm.slane %v37, 0
  %v80 = vperm.slane %v37, 1
  %v83 = vmul.f32 %v41, %v79
  %v84 = vmul.f32 %v41, %v80
  %v85 = vmul.f32 %v46, %v79
  %v86 = vmul.f32 %v46, %v80
  %v87 = vmul.f32 %v51, %v79
  %v88 = vmul.f32 %v51, %v80
  %v89 = vmul.f32 %v56, %v79
  %v90 = vmul.f32 %v56, %v80
  %v91 = vmul.f32 %v61, %v79
  %v92 = vmul.f32 %v61, %v80
  %v93 = vmul.f32 %v66, %v79
  %v94 = vmul.f32 %v66, %v80
  %v95 = vmul.f32 %v71, %v79
  %v96 = vmul.f32 %v71, %v80
  %v97 = vmul.f32 %v76, %v79
  %v98 = vmul.f32 %v76, %v80
  %s99 = scalar_lea.vmem %s0, 1
  %v100 = vld [vmem:[%s99] ss:$2 sm:$0x3]
  %101 = vset.pattern.permute.xlu0 1
  %102 = vperm.xlu0 %101, %v29
  %v103 = vpop.permute.xlu0 %102
  %105 = vset.pattern.permute.xlu0 1
  %106 = vperm.xlu0 %105, %v30
  %v107 = vpop.permute.xlu0 %106
  %109 = vset.pattern.permute.xlu0 1
  %110 = vperm.xlu0 %109, %v31
  %v111 = vpop.permute.xlu0 %110
  %113 = vset.pattern.permute.xlu0 1
  %114 = vperm.xlu0 %113, %v32
  %v115 = vpop.permute.xlu0 %114
  %117 = vset.pattern.permute.xlu0 1
  %118 = vperm.xlu0 %117, %v33
  %v119 = vpop.permute.xlu0 %118
  %121 = vset.pattern.permute.xlu0 1
  %122 = vperm.xlu0 %121, %v34
  %v123 = vpop.permute.xlu0 %122
  %125 = vset.pattern.permute.xlu0 1
  %126 = vperm.xlu0 %125, %v35
  %v127 = vpop.permute.xlu0 %126
  %129 = vset.pattern.permute.xlu0 1
  %130 = vperm.xlu0 %129, %v36
  %v131 = vpop.permute.xlu0 %130
  %v134 = vperm.slane %v100, 0
  %v135 = vperm.slane %v100, 1
  %v138 = vmul.f32 %v103, %v134
  %v139 = vmul.f32 %v103, %v135
  %v140 = vmul.f32 %v107, %v134
  %v141 = vmul.f32 %v107, %v135
  %v142 = vmul.f32 %v111, %v134
  %v143 = vmul.f32 %v111, %v135
  %v144 = vmul.f32 %v115, %v134
  %v145 = vmul.f32 %v115, %v135
  %v146 = vmul.f32 %v119, %v134
  %v147 = vmul.f32 %v119, %v135
  %v148 = vmul.f32 %v123, %v134
  %v149 = vmul.f32 %v123, %v135
  %v150 = vmul.f32 %v127, %v134
  %v151 = vmul.f32 %v127, %v135
  %v152 = vmul.f32 %v131, %v134
  %v153 = vmul.f32 %v131, %v135
  %v154 = vadd.f32 %v83, %v138
  %v155 = vadd.f32 %v84, %v139
  %v156 = vadd.f32 %v85, %v140
  %v157 = vadd.f32 %v86, %v141
  %v158 = vadd.f32 %v87, %v142
  %v159 = vadd.f32 %v88, %v143
  %v160 = vadd.f32 %v89, %v144
  %v161 = vadd.f32 %v90, %v145
  %v162 = vadd.f32 %v91, %v146
  %v163 = vadd.f32 %v92, %v147
  %v164 = vadd.f32 %v93, %v148
  %v165 = vadd.f32 %v94, %v149
  %v166 = vadd.f32 %v95, %v150
  %v167 = vadd.f32 %v96, %v151
  %v168 = vadd.f32 %v97, %v152
  %v169 = vadd.f32 %v98, %v153
  %v170 = vld [vmem:[%s2] sm:$0xff]
  %v171 = vld [vmem:[%s2 + $0x8] sm:$0xff]
  %v172 = vld [vmem:[%s2 + $0x10] sm:$0xff]
  %v173 = vld [vmem:[%s2 + $0x18] sm:$0xff]
  %v174 = vld [vmem:[%s2 + $0x20] sm:$0xff]
  %v175 = vld [vmem:[%s2 + $0x28] sm:$0xff]
  %v176 = vld [vmem:[%s2 + $0x30] sm:$0xff]
  %v177 = vld [vmem:[%s2 + $0x38] sm:$0xff]
  %179 = vset.pattern.permute.xlu0 0
  %180 = vperm.xlu0 %179, %v170
  %v181 = vpop.permute.xlu0 %180
  %184 = vset.pattern.permute.xlu0 0
  %185 = vperm.xlu0 %184, %v171
  %v186 = vpop.permute.xlu0 %185
  %189 = vset.pattern.permute.xlu0 0
  %190 = vperm.xlu0 %189, %v172
  %v191 = vpop.permute.xlu0 %190
  %194 = vset.pattern.permute.xlu0 0
  %195 = vperm.xlu0 %194, %v173
  %v196 = vpop.permute.xlu0 %195
  %199 = vset.pattern.permute.xlu0 0
  %200 = vperm.xlu0 %199, %v174
  %v201 = vpop.permute.xlu0 %200
  %204 = vset.pattern.permute.xlu0 0
  %205 = vperm.xlu0 %204, %v175
  %v206 = vpop.permute.xlu0 %205
  %209 = vset.pattern.permute.xlu0 0
  %210 = vperm.xlu0 %209, %v176
  %v211 = vpop.permute.xlu0 %210
  %214 = vset.pattern.permute.xlu0 0
  %215 = vperm.xlu0 %214, %v177
  %v216 = vpop.permute.xlu0 %215
  %v218 = vadd.f32 %v154, %v181
  %v219 = vadd.f32 %v155, %v181
  %v220 = vadd.f32 %v156, %v186
  %v221 = vadd.f32 %v157, %v186
  %v222 = vadd.f32 %v158, %v191
  %v223 = vadd.f32 %v159, %v191
  %v224 = vadd.f32 %v160, %v196
  %v225 = vadd.f32 %v161, %v196
  %v226 = vadd.f32 %v162, %v201
  %v227 = vadd.f32 %v163, %v201
  %v228 = vadd.f32 %v164, %v206
  %v229 = vadd.f32 %v165, %v206
  %v230 = vadd.f32 %v166, %v211
  %v231 = vadd.f32 %v167, %v211
  %v232 = vadd.f32 %v168, %v216
  %v233 = vadd.f32 %v169, %v216
  %v234 = vand.u32 2147483647, %v218
  %v235 = vand.u32 2147483647, %v219
  %v236 = vand.u32 2147483647, %v220
  %v237 = vand.u32 2147483647, %v221
  %v238 = vand.u32 2147483647, %v222
  %v239 = vand.u32 2147483647, %v223
  %v240 = vand.u32 2147483647, %v224
  %v241 = vand.u32 2147483647, %v225
  %v242 = vand.u32 2147483647, %v226
  %v243 = vand.u32 2147483647, %v227
  %v244 = vand.u32 2147483647, %v228
  %v245 = vand.u32 2147483647, %v229
  %v246 = vand.u32 2147483647, %v230
  %v247 = vand.u32 2147483647, %v231
  %v248 = vand.u32 2147483647, %v232
  %v249 = vand.u32 2147483647, %v233
  %v250 = vsub.f32 1.0, %v234
  %v251 = vsub.f32 1.0, %v235
  %v252 = vsub.f32 1.0, %v236
  %v253 = vsub.f32 1.0, %v237
  %v254 = vsub.f32 1.0, %v238
  %v255 = vsub.f32 1.0, %v239
  %v256 = vsub.f32 1.0, %v240
  %v257 = vsub.f32 1.0, %v241
  %v258 = vsub.f32 1.0, %v242
  %v259 = vsub.f32 1.0, %v243
  %v260 = vsub.f32 1.0, %v244
  %v261 = vsub.f32 1.0, %v245
  %v262 = vsub.f32 1.0, %v246
  %v263 = vsub.f32 1.0, %v247
  %v264 = vsub.f32 1.0, %v248
  %v265 = vsub.f32 1.0, %v249
  %v266 = vmax.f32 %v250, 1e-06
  %v267 = vmax.f32 %v251, 1e-06
  %v268 = vmax.f32 %v252, 1e-06
  %v269 = vmax.f32 %v253, 1e-06
  %v270 = vmax.f32 %v254, 1e-06
  %v271 = vmax.f32 %v255, 1e-06
  %v272 = vmax.f32 %v256, 1e-06
  %v273 = vmax.f32 %v257, 1e-06
  %v274 = vmax.f32 %v258, 1e-06
  %v275 = vmax.f32 %v259, 1e-06
  %v276 = vmax.f32 %v260, 1e-06
  %v277 = vmax.f32 %v261, 1e-06
  %v278 = vmax.f32 %v262, 1e-06
  %v279 = vmax.f32 %v263, 1e-06
  %v280 = vmax.f32 %v264, 1e-06
  %v281 = vmax.f32 %v265, 1e-06
  %v282 = vld [vmem:[%s3] sm:$0xf]
  %v283 = vld [vmem:[%s3 + $0x4] sm:$0xf]
  %v284 = vld [vmem:[%s3 + $0x8] sm:$0xf]
  %v285 = vld [vmem:[%s3 + $0xc] sm:$0xf]
  %v286 = vld [vmem:[%s3 + $0x10] sm:$0xf]
  %v287 = vld [vmem:[%s3 + $0x14] sm:$0xf]
  %v288 = vld [vmem:[%s3 + $0x18] sm:$0xf]
  %v289 = vld [vmem:[%s3 + $0x1c] sm:$0xf]
  %v290 = vpack.c.bf16 %v268, %v266
  %v291 = vpack.c.bf16 %v269, %v267
  %v292 = vpack.c.bf16 %v272, %v270
  %v293 = vpack.c.bf16 %v273, %v271
  %v294 = vpack.c.bf16 %v276, %v274
  %v295 = vpack.c.bf16 %v277, %v275
  %v296 = vpack.c.bf16 %v280, %v278
  %v297 = vpack.c.bf16 %v281, %v279
  %v298 = vld [vmem:[%s4] sm:$0xff]
  %v299 = vld [vmem:[%s4 + $0x8] sm:$0xff]
  %v300 = vld [vmem:[%s4 + $0x10] sm:$0xff]
  %v301 = vld [vmem:[%s4 + $0x18] sm:$0xff]
  %v302 = vld [vmem:[%s4 + $0x20] sm:$0xff]
  %v303 = vld [vmem:[%s4 + $0x28] sm:$0xff]
  %v304 = vld [vmem:[%s4 + $0x30] sm:$0xff]
  %v305 = vld [vmem:[%s4 + $0x38] sm:$0xff]
  %307 = vset.pattern.permute.xlu0 0
  %308 = vperm.xlu0 %307, %v298
  %v309 = vpop.permute.xlu0 %308
  %312 = vset.pattern.permute.xlu0 0
  %313 = vperm.xlu0 %312, %v299
  %v314 = vpop.permute.xlu0 %313
  %317 = vset.pattern.permute.xlu0 0
  %318 = vperm.xlu0 %317, %v300
  %v319 = vpop.permute.xlu0 %318
  %322 = vset.pattern.permute.xlu0 0
  %323 = vperm.xlu0 %322, %v301
  %v324 = vpop.permute.xlu0 %323
  %327 = vset.pattern.permute.xlu0 0
  %328 = vperm.xlu0 %327, %v302
  %v329 = vpop.permute.xlu0 %328
  %332 = vset.pattern.permute.xlu0 0
  %333 = vperm.xlu0 %332, %v303
  %v334 = vpop.permute.xlu0 %333
  %337 = vset.pattern.permute.xlu0 0
  %338 = vperm.xlu0 %337, %v304
  %v339 = vpop.permute.xlu0 %338
  %342 = vset.pattern.permute.xlu0 0
  %343 = vperm.xlu0 %342, %v305
  %v344 = vpop.permute.xlu0 %343
  %v354 = vunpack.c.l.b16 %v282
  %v355 = vunpack.c.l.b16 %v283
  %v356 = vunpack.c.l.b16 %v284
  %v357 = vunpack.c.l.b16 %v285
  %v358 = vunpack.c.l.b16 %v286
  %v359 = vunpack.c.l.b16 %v287
  %v360 = vunpack.c.l.b16 %v288
  %v361 = vunpack.c.l.b16 %v289
  %v362 = vpack.c.b16 %v355, %v354
  %v363 = vpack.c.b16 %v357, %v356
  %v364 = vpack.c.b16 %v359, %v358
  %v365 = vpack.c.b16 %v361, %v360
  %vm366 = vcmask 523264
  %v368 = vsel %vm366, %v362, 0
  %v371 = vsel %vm366, %v363, 0
  %v374 = vsel %vm366, %v364, 0
  %v377 = vsel %vm366, %v365, 0
  %379 = vmatpush.bf16.msra.mxu0 0
  %380 = vmatpush.bf16.msra.mxu0 0
  %381 = vmatpush.bf16.msra.mxu0 0
  %382 = vmatpush.bf16.msra.mxu0 0
  %383 = vmatpush.bf16.msra.mxu0 %v296
  %384 = vmatpush.bf16.msra.mxu0 %v294
  %385 = vmatpush.bf16.msra.mxu0 %v292
  %386 = vmatpush.bf16.msra.mxu0 %v290
  %387 = vmatmul.bf16.gmra.mxu0 %v368
  %v388 = vpop.f32.mrf.mxu0
  %v389 = vadd.f32 %v309, %v388
  %v390 = vpop.f32.mrf.mxu0
  %v391 = vadd.f32 %v314, %v390
  %392 = vmatmul.bf16.gmra.mxu0 %v371
  %v393 = vpop.f32.mrf.mxu0
  %v394 = vadd.f32 %v319, %v393
  %v395 = vpop.f32.mrf.mxu0
  %v396 = vadd.f32 %v324, %v395
  %397 = vmatmul.bf16.gmra.mxu0 %v374
  %v398 = vpop.f32.mrf.mxu0
  %v399 = vadd.f32 %v329, %v398
  %v400 = vpop.f32.mrf.mxu0
  %v401 = vadd.f32 %v334, %v400
  %402 = vmatmul.bf16.gmra.mxu0 %v377
  %v403 = vpop.f32.mrf.mxu0
  %v404 = vadd.f32 %v339, %v403
  %v405 = vpop.f32.mrf.mxu0
  %v406 = vadd.f32 %v344, %v405
  %407 = vdwg.mxu0
  %408 = vmatpush.bf16.msra.mxu0 0
  %409 = vmatpush.bf16.msra.mxu0 0
  %410 = vmatpush.bf16.msra.mxu0 0
  %411 = vmatpush.bf16.msra.mxu0 0
  %412 = vmatpush.bf16.msra.mxu0 %v297
  %413 = vmatpush.bf16.msra.mxu0 %v295
  %414 = vmatpush.bf16.msra.mxu0 %v293
  %415 = vmatpush.bf16.msra.mxu0 %v291
  %416 = vmatmul.bf16.gmra.mxu0 %v368
  %v417 = vpop.f32.mrf.mxu0
  %v418 = vadd.f32 %v309, %v417
  %v419 = vpop.f32.mrf.mxu0
  %v420 = vadd.f32 %v314, %v419
  %421 = vmatmul.bf16.gmra.mxu0 %v371
  %v422 = vpop.f32.mrf.mxu0
  %v423 = vadd.f32 %v319, %v422
  %v424 = vpop.f32.mrf.mxu0
  %v425 = vadd.f32 %v324, %v424
  %426 = vmatmul.bf16.gmra.mxu0 %v374
  %v427 = vpop.f32.mrf.mxu0
  %v428 = vadd.f32 %v329, %v427
  %v429 = vpop.f32.mrf.mxu0
  %v430 = vadd.f32 %v334, %v429
  %431 = vmatmul.bf16.gmra.mxu0 %v377
  %v432 = vpop.f32.mrf.mxu0
  %v433 = vadd.f32 %v339, %v432
  %v434 = vpop.f32.mrf.mxu0
  %v435 = vadd.f32 %v344, %v434
  %436 = vdwg.mxu0
  %v437 = vand.u32 2147483647, %v389
  %v438 = vand.u32 2147483647, %v418
  %v439 = vand.u32 2147483647, %v391
  %v440 = vand.u32 2147483647, %v420
  %v441 = vand.u32 2147483647, %v394
  %v442 = vand.u32 2147483647, %v423
  %v443 = vand.u32 2147483647, %v396
  %v444 = vand.u32 2147483647, %v425
  %v445 = vand.u32 2147483647, %v399
  %v446 = vand.u32 2147483647, %v428
  %v447 = vand.u32 2147483647, %v401
  %v448 = vand.u32 2147483647, %v430
  %v449 = vand.u32 2147483647, %v404
  %v450 = vand.u32 2147483647, %v433
  %v451 = vand.u32 2147483647, %v406
  %v452 = vand.u32 2147483647, %v435
  %v453 = vsub.f32 1.0, %v437
  %v454 = vsub.f32 1.0, %v438
  %v455 = vsub.f32 1.0, %v439
  %v456 = vsub.f32 1.0, %v440
  %v457 = vsub.f32 1.0, %v441
  %v458 = vsub.f32 1.0, %v442
  %v459 = vsub.f32 1.0, %v443
  %v460 = vsub.f32 1.0, %v444
  %v461 = vsub.f32 1.0, %v445
  %v462 = vsub.f32 1.0, %v446
  %v463 = vsub.f32 1.0, %v447
  %v464 = vsub.f32 1.0, %v448
  %v465 = vsub.f32 1.0, %v449
  %v466 = vsub.f32 1.0, %v450
  %v467 = vsub.f32 1.0, %v451
  %v468 = vsub.f32 1.0, %v452
  %v469 = vmax.f32 %v453, 1e-06
  %v470 = vmax.f32 %v454, 1e-06
  %v471 = vmax.f32 %v455, 1e-06
  %v472 = vmax.f32 %v456, 1e-06
  %v473 = vmax.f32 %v457, 1e-06
  %v474 = vmax.f32 %v458, 1e-06
  %v475 = vmax.f32 %v459, 1e-06
  %v476 = vmax.f32 %v460, 1e-06
  %v477 = vmax.f32 %v461, 1e-06
  %v478 = vmax.f32 %v462, 1e-06
  %v479 = vmax.f32 %v463, 1e-06
  %v480 = vmax.f32 %v464, 1e-06
  %v481 = vmax.f32 %v465, 1e-06
  %v482 = vmax.f32 %v466, 1e-06
  %v483 = vmax.f32 %v467, 1e-06
  %v484 = vmax.f32 %v468, 1e-06
  %v485 = vld [vmem:[%s5] sm:$0x1]
  %v486 = vpack.c.bf16 %v471, %v469
  %v487 = vpack.c.bf16 %v472, %v470
  %v488 = vpack.c.bf16 %v475, %v473
  %v489 = vpack.c.bf16 %v476, %v474
  %v490 = vpack.c.bf16 %v479, %v477
  %v491 = vpack.c.bf16 %v480, %v478
  %v492 = vpack.c.bf16 %v483, %v481
  %v493 = vpack.c.bf16 %v484, %v482
  %v494 = vld [vmem:[#allocation2] sm:$0x1]
  %496 = vset.pattern.permute.xlu0 0
  %497 = vperm.xlu0 %496, %v494
  %v498 = vpop.permute.xlu0 %497
  %v500 = vperm.slane %v498, 0
  %v502 = vsel %vm366, %v485, 0
  %504 = vmatpush.bf16.msra.mxu0 0
  %505 = vmatpush.bf16.msra.mxu0 0
  %506 = vmatpush.bf16.msra.mxu0 0
  %507 = vmatpush.bf16.msra.mxu0 0
  %508 = vmatpush.bf16.msra.mxu0 %v492
  %509 = vmatpush.bf16.msra.mxu0 %v490
  %510 = vmatpush.bf16.msra.mxu0 %v488
  %511 = vmatpush.bf16.msra.mxu0 %v486
  %512 = vmatmul.bf16.gmra.mxu0 %v502
  %v513 = vpop.f32.mrf.mxu0
  %v514 = vadd.f32 %v500, %v513
  %v515 = vpop.f32.mrf.mxu0
  %516 = vdwg.mxu0
  %517 = vmatpush.bf16.msra.mxu0 0
  %518 = vmatpush.bf16.msra.mxu0 0
  %519 = vmatpush.bf16.msra.mxu0 0
  %520 = vmatpush.bf16.msra.mxu0 0
  %521 = vmatpush.bf16.msra.mxu0 %v493
  %522 = vmatpush.bf16.msra.mxu0 %v491
  %523 = vmatpush.bf16.msra.mxu0 %v489
  %524 = vmatpush.bf16.msra.mxu0 %v487
  %525 = vmatmul.bf16.gmra.mxu0 %v502
  %v526 = vpop.f32.mrf.mxu0
  %v527 = vadd.f32 %v500, %v526
  %v528 = vpop.f32.mrf.mxu0
  %529 = vdwg.mxu0
  %v532 = vrot.slane %v527, 7
  %vm533 = vcmask 1040384
  %v534 = vsel %vm533, %v514, %v532
  %v536 = vlaneseq
  %vm537 = vcmp.ge.s32.totalorder %v536, 0
  %vm538 = vcmp.lt.s32.totalorder %v536, 256
  %vm539 = vmand %vm537, %vm538
  %540 = vst.msk [vmem:[%s7] sm:$0x3] %vm539, %v534
  // Predicated region
  $region30: #{_tent_forward.1} parent=0 // pred_check
    _
  $region31: #{_tent_forward.1} parent=0 // pred_check_branch
    %542 = sbr.rel (0) target = $region33
  $region32: #{_tent_forward.1} parent=0 // pred_region
    _
  $region33: #{_tent_forward.1} parent=0 // pred_fallthru
    _
  // Predicated region
  $region34: #{_tent_forward.1} parent=0 // pred_check
    _
  $region35: #{_tent_forward.1} parent=0 // pred_check_branch
    %544 = sbr.rel (0) target = $region37
  $region36: #{_tent_forward.1} parent=0 // pred_region
    _
  $region37: #{_tent_forward.1} parent=0 // pred_fallthru
    _

</llo_original>
